<compile_context>
chip_gen: v7x
topology: tpu7x:2x2x1
jax: 0.10.0
libtpu: 0.0.40
codegen_flags: <defaults>
</compile_context>

<pallas_src>
import jax
import jax.numpy as jnp
from jax.experimental import pallas as pl
from jax.experimental.pallas import tpu as pltpu


def gaussian_sample_kernel(x_ref, w_ref, b_ref, eps_ref, z_ref, mu_ref, lv_ref):
    d_out = mu_ref.shape[-1]

    # Single fused matmul for both heads: [B, D_in] @ [D_in, 2*D_out].
    y = jnp.dot(x_ref[...], w_ref[...],
                preferred_element_type=jnp.float32) + b_ref[...]

    mu = y[:, :d_out]
    lv = y[:, d_out:]

    # Reparameterization trick: z = mu + exp(0.5 * log_var) * eps.
    z = mu + jnp.exp(0.5 * lv) * eps_ref[...]

    z_ref[...] = z.astype(z_ref.dtype)
    mu_ref[...] = mu.astype(mu_ref.dtype)
    lv_ref[...] = lv.astype(lv_ref.dtype)


def pack_gaussian_sample_params(w_mu, b_mu, w_lv, b_lv):
    """Pack the two linear heads into one slab. Call ONCE at init, not per step.

    w_*: [D_in, D_out] (already transposed from nn.Linear's [out, in]);
    b_*: [D_out].  Returns (w_cat [D_in, 2*D_out], b_cat [1, 2*D_out])."""
    w_cat = jnp.concatenate([w_mu, w_lv], axis=1).astype(jnp.float32)
    b_cat = jnp.concatenate(
        [jnp.reshape(b_mu, (1, -1)), jnp.reshape(b_lv, (1, -1))],
        axis=1).astype(jnp.float32)
    return w_cat, b_cat


@jax.jit
def gaussian_sample(x, w_cat, b_cat, key):
    """x: [B, D_in]; w_cat: [D_in, 2*D_out]; b_cat: [1, 2*D_out];
    key: jax PRNG key (fresh per call, like torch.randn_like).
    Returns (z, mu, log_var), each [B, D_out] f32."""
    B, _ = x.shape
    D_out = w_cat.shape[1] // 2

    # eps ~ N(0, 1), sized to the useful lanes only.
    eps = jax.random.normal(key, (B, D_out), dtype=jnp.float32)

    out_sd = jax.ShapeDtypeStruct((B, D_out), jnp.float32)
    vmem = pl.BlockSpec(memory_space=pltpu.MemorySpace.VMEM)

    z, mu, lv = pl.pallas_call(
        gaussian_sample_kernel,
        out_shape=(out_sd, out_sd, out_sd),
        in_specs=[vmem, vmem, vmem, vmem],
        out_specs=(vmem, vmem, vmem),
    )(x, w_cat, b_cat, eps)
    return z, mu, lv


if __name__ == "__main__":
    # Small shapes consistent with GaussianSample(input_dim=32, output_dim=16).
    B, D_in, D_out = 8, 32, 16

    key = jax.random.PRNGKey(0)
    k_x, k_wmu, k_bmu, k_wlv, k_blv, k_eps = jax.random.split(key, 6)

    x = jax.random.normal(k_x, (B, D_in), dtype=jnp.float32)

    # nn.Linear-style uniform(-1/sqrt(fan_in), 1/sqrt(fan_in)) init,
    # stored pre-transposed as [D_in, D_out].
    bound = 1.0 / (D_in ** 0.5)
    w_mu = jax.random.uniform(k_wmu, (D_in, D_out), minval=-bound, maxval=bound,
                              dtype=jnp.float32)
    b_mu = jax.random.uniform(k_bmu, (D_out,), minval=-bound, maxval=bound,
                              dtype=jnp.float32)
    w_lv = jax.random.uniform(k_wlv, (D_in, D_out), minval=-bound, maxval=bound,
                              dtype=jnp.float32)
    b_lv = jax.random.uniform(k_blv, (D_out,), minval=-bound, maxval=bound,
                              dtype=jnp.float32)

    # Pack once (init-time), reuse every step.
    w_cat, b_cat = pack_gaussian_sample_params(w_mu, b_mu, w_lv, b_lv)

    z, mu, log_var = gaussian_sample(x, w_cat, b_cat, k_eps)
    jax.block_until_ready((z, mu, log_var))

    # Pure-JAX reference (same eps since the wrapper uses the same key).
    mu_ref = x @ w_mu + b_mu.reshape(1, -1)
    lv_ref = x @ w_lv + b_lv.reshape(1, -1)
    eps_ref = jax.random.normal(k_eps, (B, D_out), dtype=jnp.float32)
    z_ref = mu_ref + jnp.exp(0.5 * lv_ref) * eps_ref

    assert jnp.allclose(mu, mu_ref, atol=1e-5), "mu mismatch"
    assert jnp.allclose(log_var, lv_ref, atol=1e-5), "log_var mismatch"
    assert jnp.allclose(z, z_ref, atol=1e-5), "z mismatch"
    assert bool(jnp.all(jnp.isfinite(z))), "z not finite"

    print("KERNEL_OK")
</pallas_src>

<mosaic_0001>
module attributes {stable_mosaic.version = 11 : i64} {
  func.func @gaussian_sample_kernel(%arg0: memref<8x32xf32, #tpu.memory_space<vmem>>, %arg1: memref<32x32xf32, #tpu.memory_space<vmem>>, %arg2: memref<1x32xf32, #tpu.memory_space<vmem>>, %arg3: memref<8x16xf32, #tpu.memory_space<vmem>>, %arg4: memref<8x16xf32, #tpu.memory_space<vmem>>, %arg5: memref<8x16xf32, #tpu.memory_space<vmem>>, %arg6: memref<8x16xf32, #tpu.memory_space<vmem>>) attributes {dimension_semantics = [], scalar_prefetch = 0 : i64, scratch_operands = 0 : i64, tpu.core_type = #tpu.core_type<tc>} {
    %c0 = arith.constant 0 : index
    %c0_0 = arith.constant 0 : index
    %0 = vector.load %arg0[%c0, %c0_0] : memref<8x32xf32, #tpu.memory_space<vmem>>, vector<8x32xf32>
    %c0_1 = arith.constant 0 : index
    %c0_2 = arith.constant 0 : index
    %1 = vector.load %arg1[%c0_1, %c0_2] : memref<32x32xf32, #tpu.memory_space<vmem>>, vector<32x32xf32>
    %cst = arith.constant dense<0.000000e+00> : vector<8x32xf32>
    %2 = tpu.matmul %0, %1, %cst {dimension_numbers = #tpu.dot_dimension_numbers<[1], [0], [0], [1], [0, 0, 1, 1], [], []>} : vector<8x32xf32>, vector<32x32xf32>, vector<8x32xf32> -> vector<8x32xf32>
    %c0_3 = arith.constant 0 : index
    %c0_4 = arith.constant 0 : index
    %3 = vector.load %arg2[%c0_3, %c0_4] : memref<1x32xf32, #tpu.memory_space<vmem>>, vector<1x32xf32>
    %4 = vector.broadcast %3 : vector<1x32xf32> to vector<8x32xf32>
    %5 = arith.addf %2, %4 : vector<8x32xf32>
    %6 = vector.extract_strided_slice %5 {offsets = [0, 0], sizes = [8, 16], strides = [1, 1]} : vector<8x32xf32> to vector<8x16xf32>
    %7 = vector.extract_strided_slice %5 {offsets = [0, 16], sizes = [8, 16], strides = [1, 1]} : vector<8x32xf32> to vector<8x16xf32>
    %cst_5 = arith.constant 5.000000e-01 : f32
    %8 = vector.broadcast %cst_5 : f32 to vector<8x16xf32>
    %9 = arith.mulf %8, %7 : vector<8x16xf32>
    %10 = math.exp %9 : vector<8x16xf32>
    %c0_6 = arith.constant 0 : index
    %c0_7 = arith.constant 0 : index
    %11 = vector.load %arg3[%c0_6, %c0_7] : memref<8x16xf32, #tpu.memory_space<vmem>>, vector<8x16xf32>
    %12 = arith.mulf %10, %11 : vector<8x16xf32>
    %13 = arith.addf %6, %12 : vector<8x16xf32>
    %c0_8 = arith.constant 0 : index
    %c0_9 = arith.constant 0 : index
    %14 = vector.load %arg4[%c0_8, %c0_9] : memref<8x16xf32, #tpu.memory_space<vmem>>, vector<8x16xf32>
    tpu.vector_store %arg4[%c0_8, %c0_9], %13 {strides = array<i32>} : memref<8x16xf32, #tpu.memory_space<vmem>>, vector<8x16xf32>,
    %c0_10 = arith.constant 0 : index
    %c0_11 = arith.constant 0 : index
    %15 = vector.load %arg5[%c0_10, %c0_11] : memref<8x16xf32, #tpu.memory_space<vmem>>, vector<8x16xf32>
    tpu.vector_store %arg5[%c0_10, %c0_11], %6 {strides = array<i32>} : memref<8x16xf32, #tpu.memory_space<vmem>>, vector<8x16xf32>,
    %c0_12 = arith.constant 0 : index
    %c0_13 = arith.constant 0 : index
    %16 = vector.load %arg6[%c0_12, %c0_13] : memref<8x16xf32, #tpu.memory_space<vmem>>, vector<8x16xf32>
    tpu.vector_store %arg6[%c0_12, %c0_13], %7 {strides = array<i32>} : memref<8x16xf32, #tpu.memory_space<vmem>>, vector<8x16xf32>,
    return
  }
}

</mosaic_0001>

<llo_original>
// kernel: gaussian_sample.1
$region0: #{gaussian_sample.1}
  #allocation0 [shape = 'u32[]', space=smem, size = 0x4, offset = 0x4, fixed_abs, tag = 'smem constant byte address 0x4 - core index']
  #allocation1 [shape = 'u32[144,128]{1,0:T(1,128)}', space=vmem, size = 0x12000, scoped, tag = 'internal scratch']
  %s0 = inlined_call_operand.vmem [shape: f32[8,32], index: 0, kind: input, shape index: {}]
  %s1 = inlined_call_operand.vmem [shape: f32[32,32], index: 1, kind: input, shape index: {}]
  %s2 = inlined_call_operand.vmem [shape: f32[1,32], index: 2, kind: input, shape index: {}]
  %s3 = inlined_call_operand.vmem [shape: f32[8,16], index: 3, kind: input, shape index: {}]
  %s4 = inlined_call_operand.hbm [shape: f32[8,16], index: 4, kind: output, shape index: {0}]
  %s5 = inlined_call_operand.hbm [shape: f32[8,16], index: 5, kind: output, shape index: {1}]
  %s6 = inlined_call_operand.hbm [shape: f32[8,16], index: 6, kind: output, shape index: {2}]
  %7 = xla_tuple %s4, %s5, %s6
  %s8 = sld [smem:[#allocation0]]
  $region42: #{gaussian_sample.1} parent=0
    _
  %s10 = ssub.s32 1, %s8
  %s11 = scalar_select 0, %s10, %s8
  $region1: #{gaussian_sample.1} parent=0
    #allocation2 [shape = 'u8[4096]{0}', space=vmem, size = 0x1000, scoped, tag = 'output window, operand 0, single buffered']
    #allocation3 [shape = 's32[1]{0}', space=sflag, size = 0x4, scoped, tag = 'scoped memory for gaussian_sample.1']
    #allocation4 [shape = 'u8[4096]{0}', space=vmem, size = 0x1000, scoped, tag = 'output window, operand 1, single buffered']
    #allocation5 [shape = 's32[1]{0}', space=sflag, size = 0x4, scoped, tag = 'scoped memory for gaussian_sample.1']
    #allocation6 [shape = 'u8[4096]{0}', space=vmem, size = 0x1000, scoped, tag = 'output window, operand 2, single buffered']
    %12 = vsyncpa [#allocation3], 0
    %13 = vsyncpa [#allocation5], 0
    // Predicated region
    $region2: #{gaussian_sample.1} parent=1 // pred_check
      _
    $region3: #{gaussian_sample.1} parent=1 // pred_check_branch
      %15 = sbr.rel (0) target = $region5
    $region4: #{gaussian_sample.1} parent=1 // pred_region
      _
    $region5: #{gaussian_sample.1} parent=1 // pred_fallthru
      _
    // Predicated region
    $region6: #{gaussian_sample.1} parent=1 // pred_check
      _
    $region7: #{gaussian_sample.1} parent=1 // pred_check_branch
      %17 = sbr.rel (0) target = $region9
    $region8: #{gaussian_sample.1} parent=1 // pred_region
      _
    $region9: #{gaussian_sample.1} parent=1 // pred_fallthru
      _
    // Predicated region
    $region10: #{gaussian_sample.1} parent=1 // pred_check
      _
    $region11: #{gaussian_sample.1} parent=1 // pred_check_branch
      %19 = sbr.rel (0) target = $region13
    $region12: #{gaussian_sample.1} parent=1 // pred_region
      _
    $region13: #{gaussian_sample.1} parent=1 // pred_fallthru
      _
    // Predicated region
    $region14: #{gaussian_sample.1} parent=1 // pred_check
      _
    $region15: #{gaussian_sample.1} parent=1 // pred_check_branch
      %21 = sbr.rel (0) target = $region17
    $region16: #{gaussian_sample.1} parent=1 // pred_region
      _
    $region17: #{gaussian_sample.1} parent=1 // pred_fallthru
      _
    %v22 = vld [vmem:[%s0] sm:$0xff]
    %v23 = vld [vmem:[%s1] sm:$0xff]
    %v24 = vld [vmem:[%s1 + $0x8] sm:$0xff]
    %v25 = vld [vmem:[%s1 + $0x10] sm:$0xff]
    %v26 = vld [vmem:[%s1 + $0x18] sm:$0xff]
    %v27 = vld [vmem:[%s2] sm:$0x1]
    %v29 = vlaneseq
    %v30 = vshrl.u32 %v29, 7
    %v31 = vsub.s32 0, %v30
    %v32 = vrot.slane %v27, %v31
    %vm34 = vcmask 261120
    %v36 = vsel %vm34, %v22, 0
    %38 = vmatprep.subr.mxu0 0.0
    %39 = vmatpush1.msra.mxu0 %v23
    %40 = vmatprep.subr.mxu0 0.0
    %41 = vmatpush1.msra.mxu0 %v24
    %42 = vmatprep.subr.mxu0 0.0
    %43 = vmatpush1.msra.mxu0 %v25
    %44 = vmatprep.subr.mxu0 0.0
    %45 = vmatpush1.msra.mxu0 %v26
    %46 = vmatprep.subr.mxu0 0.0
    %47 = vmatpush1.msra.mxu0 0.0
    %48 = vmatprep.subr.mxu0 0.0
    %49 = vmatpush1.msra.mxu0 0.0
    %50 = vmatprep.subr.mxu0 0.0
    %51 = vmatpush1.msra.mxu0 0.0
    %52 = vmatprep.subr.mxu0 0.0
    %53 = vmatpush1.msra.mxu0 0.0
    %54 = vmatprep.subr.mxu0 0.0
    %55 = vmatpush1.msra.mxu0 0.0
    %56 = vmatprep.subr.mxu0 0.0
    %57 = vmatpush1.msra.mxu0 0.0
    %58 = vmatprep.subr.mxu0 0.0
    %59 = vmatpush1.msra.mxu0 0.0
    %60 = vmatprep.subr.mxu0 0.0
    %61 = vmatpush1.msra.mxu0 0.0
    %62 = vmatprep.subr.mxu0 0.0
    %63 = vmatpush1.msra.mxu0 0.0
    %64 = vmatprep.subr.mxu0 0.0
    %65 = vmatpush1.msra.mxu0 0.0
    %66 = vmatprep.subr.mxu0 0.0
    %67 = vmatpush1.msra.mxu0 0.0
    %68 = vmatprep.subr.mxu0 0.0
    %69 = vmatpush1.msra.mxu0 0.0
    %70 = vmatprep.subr.mxu0 0.0
    %71 = vmatpush1.msra.mxu0 0.0
    %72 = vmatprep.subr.mxu0 0.0
    %73 = vmatpush1.msra.mxu0 0.0
    %74 = vmatprep.subr.mxu0 0.0
    %75 = vmatpush1.msra.mxu0 0.0
    %76 = vmatprep.subr.mxu0 0.0
    %77 = vmatpush1.msra.mxu0 0.0
    %78 = vmatprep.subr.mxu0 0.0
    %79 = vmatpush1.msra.mxu0 0.0
    %80 = vmatprep.subr.mxu0 0.0
    %81 = vmatpush1.msra.mxu0 0.0
    %82 = vmatprep.subr.mxu0 0.0
    %83 = vmatpush1.msra.mxu0 0.0
    %84 = vmatprep.subr.mxu0 0.0
    %85 = vmatpush1.msra.mxu0 0.0
    %86 = vmatprep.subr.mxu0 0.0
    %87 = vmatpush1.msra.mxu0 0.0
    %88 = vmatprep.subr.mxu0 0.0
    %89 = vmatpush1.msra.mxu0 0.0
    %90 = vmatprep.subr.mxu0 0.0
    %91 = vmatpush1.msra.mxu0 0.0
    %92 = vmatprep.subr.mxu0 0.0
    %93 = vmatpush1.msra.mxu0 0.0
    %94 = vmatprep.subr.mxu0 0.0
    %95 = vmatpush1.msra.mxu0 0.0
    %96 = vmatprep.subr.mxu0 0.0
    %97 = vmatpush1.msra.mxu0 0.0
    %98 = vmatprep.subr.mxu0 0.0
    %99 = vmatpush1.msra.mxu0 0.0
    %100 = vmatprep.subr.mxu0 0.0
    %101 = vmatpush1.msra.mxu0 0.0
    %102 = vmatprep.mubr.f32.mxu0 0.0
    %103 = vmatmul.mubr.f32.gmra.mrb[0].mxu0 %v36
    %v104 = vpop.f32.mrb[0].mxu0
    %v105 = vadd.f32 %v32, %v104
    %v106 = vpop.f32.mrb[0].mxu0
    %107 = vdwg.mxu0
    %v108 = vmul.f32 %v105, 0.5
    %v109 = vmul.f32 %v108, 1.442695
    %v110 = vpow.pop %v109
    %v111 = vld [vmem:[%s3] sm:$0xff]
    %113 = vrot.lane.b32.xlu0 %v111, 16
    %v114 = vpop.permute.xlu0 %113
    %v116 = vmul.f32 %v110, %v114
    %118 = vrot.lane.b32.xlu0 %v116, 112
    %v119 = vpop.permute.xlu0 %118
    %v121 = vadd.f32 %v105, %v119
    %vm122 = vcmask 130048
    %123 = vst.msk [vmem:[#allocation2] sm:$0xff] %vm122, %v121
    %124 = vst.msk [vmem:[#allocation4] sm:$0xff] %vm122, %v105
    %126 = vrot.lane.b32.xlu0 %v105, 112
    %v127 = vpop.permute.xlu0 %126
    %129 = vst.msk [vmem:[#allocation6] sm:$0xff] %vm122, %v127
    // Predicated region
    $region18: #{gaussian_sample.1} parent=1 // pred_check
      _
    $region19: #{gaussian_sample.1} parent=1 // pred_check_branch
      %131 = sbr.rel (0) target = $region21
    $region20: #{gaussian_sample.1} parent=1 // pred_region
      %s133 = ssub.s32 128, 128
      %134 = vsyncadd [#allocation3], %s133
      %s136 = sshll.u32 [#allocation2], 4
      %s137 = int_to_ptr.vmem [resolvable:$true] %s136
      %139 = dma.vmem_to_hbm [thread:$0]  %s137, 128, %s4, [#allocation3]
    $region21: #{gaussian_sample.1} parent=1 // pred_fallthru
      _
    // Predicated region
    $region22: #{gaussian_sample.1} parent=1 // pred_check
      _
    $region23: #{gaussian_sample.1} parent=1 // pred_check_branch
      %141 = sbr.rel (0) target = $region25
    $region24: #{gaussian_sample.1} parent=1 // pred_region
      %s143 = ssub.s32 128, 128
      %144 = vsyncadd [#allocation5], %s143
      %s146 = sshll.u32 [#allocation4], 4
      %s147 = int_to_ptr.vmem [resolvable:$true] %s146
      %149 = dma.vmem_to_hbm [thread:$0]  %s147, 128, %s5, [#allocation5]
    $region25: #{gaussian_sample.1} parent=1 // pred_fallthru
      _
    // Predicated region
    $region26: #{gaussian_sample.1} parent=1 // pred_check
      _
    $region27: #{gaussian_sample.1} parent=1 // pred_check_branch
      %151 = sbr.rel (0) target = $region29
    $region28: #{gaussian_sample.1} parent=1 // pred_region
      %s153 = ssub.s32 128, 128
      %154 = vsyncadd [#allocation5], %s153
      %s156 = sshll.u32 [#allocation6], 4
      %s157 = int_to_ptr.vmem [resolvable:$true] %s156
      %159 = dma.vmem_to_hbm [thread:$0]  %s157, 128, %s6, [#allocation5]
    $region29: #{gaussian_sample.1} parent=1 // pred_fallthru
      _
    // Predicated region
    $region30: #{gaussian_sample.1} parent=1 // pred_check
      _
    $region31: #{gaussian_sample.1} parent=1 // pred_check_branch
      %161 = sbr.rel (0) target = $region33
    $region32: #{gaussian_sample.1} parent=1 // pred_region
      %162 = dma.done [#allocation3], 128
    $region33: #{gaussian_sample.1} parent=1 // pred_fallthru
      _
    // Predicated region
    $region34: #{gaussian_sample.1} parent=1 // pred_check
      _
    $region35: #{gaussian_sample.1} parent=1 // pred_check_branch
      %164 = sbr.rel (0) target = $region37
    $region36: #{gaussian_sample.1} parent=1 // pred_region
      %165 = dma.done [#allocation5], 128
    $region37: #{gaussian_sample.1} parent=1 // pred_fallthru
      _
    // Predicated region
    $region38: #{gaussian_sample.1} parent=1 // pred_check
      _
    $region39: #{gaussian_sample.1} parent=1 // pred_check_branch
      %167 = sbr.rel (0) target = $region41
    $region40: #{gaussian_sample.1} parent=1 // pred_region
      %168 = dma.done [#allocation5], 128
    $region41: #{gaussian_sample.1} parent=1 // pred_fallthru
      _
    %169 = vsyncpa [#allocation3], 1
    %170 = vsyncpa [#allocation5], 1

</llo_original>
